<compile_context>
chip_gen: v7x
topology: tpu7x:2x2x1
jax: 0.10.0
libtpu: 0.0.40
codegen_flags: <defaults>
</compile_context>

<pallas_src>
import jax
import jax.numpy as jnp
from jax.experimental import pallas as pl
from jax.experimental.pallas import tpu as pltpu


def _round_up(x, m):
    return (x + m - 1) // m * m


# ----------------------------------------------------------------------------
# Kernel 1: edge geometry (src_norm_dst + fn.v_sub_u) for BOTH graphs in one
# call; lane-dense [3, E] layout, E tiled on a 1-D "parallel" grid.
# ----------------------------------------------------------------------------
def _edge_geom_kernel(src_ref, dst_ref, dist_ref, vec_ref):
    src = src_ref[...]                      # [3, Eb]
    dst = dst_ref[...]                      # [3, Eb]
    diff = src - dst
    sq = diff * diff
    # unrolled 3-term sum keeps this on the VPU (no XLU reduce needed)
    # NOTE: no epsilon under the sqrt (forward-only, matches the PyTorch spec).
    dist_ref[...] = jnp.sqrt(sq[0:1, :] + sq[1:2, :] + sq[2:3, :])   # [1, Eb]
    vec_ref[...] = dst - src                                          # [3, Eb]


def edge_geometry_pair(src1, dst1, src2, dst2):
    """Merged edge geometry for two graphs.

    Returns (dist1 [E1], vec1 [E1,3], dist2 [E2], vec2 [E2,3])."""
    E1 = src1.shape[0]
    E2 = src2.shape[0]
    Et = E1 + E2
    # layout plumbing outside the kernel: edges go on the 128-lane axis
    src = jnp.concatenate([src1, src2], axis=0).T.astype(jnp.float32)   # [3, Et]
    dst = jnp.concatenate([dst1, dst2], axis=0).T.astype(jnp.float32)
    e_blk = min(1024, _round_up(Et, 128))
    Ep = _round_up(Et, e_blk)
    if Ep != Et:
        src = jnp.pad(src, ((0, 0), (0, Ep - Et)))
        dst = jnp.pad(dst, ((0, 0), (0, Ep - Et)))

    dist, vec = pl.pallas_call(
        _edge_geom_kernel,
        out_shape=(jax.ShapeDtypeStruct((1, Ep), jnp.float32),
                   jax.ShapeDtypeStruct((3, Ep), jnp.float32)),
        grid_spec=pltpu.PrefetchScalarGridSpec(
            num_scalar_prefetch=0,
            grid=(Ep // e_blk,),
            in_specs=[pl.BlockSpec((3, e_blk), lambda i: (0, i)),
                      pl.BlockSpec((3, e_blk), lambda i: (0, i))],
            out_specs=(pl.BlockSpec((1, e_blk), lambda i: (0, i)),
                       pl.BlockSpec((3, e_blk), lambda i: (0, i))),
        ),
        compiler_params=pltpu.CompilerParams(dimension_semantics=("parallel",)),
    )(src, dst)

    dist = dist.reshape(Ep)
    vec = vec.T
    return dist[:E1], vec[:E1], dist[E1:Et], vec[E1:Et]


# ----------------------------------------------------------------------------
# Kernel 2: fused masked readout + LayerNorm + FNN head
#   grid = (B_pad // b_blk, A_pad // a_blk); atom axis is the (innermost)
#   reduction -> "arbitrary"; batch axis is "parallel" (megacore sharding).
#   acc_ref accumulates sum_a(emb1*mask1) - sum_a(emb2*mask2) == emb1_mol - emb2_mol
# ----------------------------------------------------------------------------
def _readout_head_kernel(emb1_ref, emb2_ref, m1_ref, m2_ref,
                         gamma_ref, beta_ref,
                         w1_ref, b1_ref, w2_ref, b2_ref,
                         w3_ref, b3_ref, w4_ref, b4_ref,
                         out_ref, acc_ref):
    a_idx = pl.program_id(1)

    @pl.when(a_idx == 0)
    def _init():
        acc_ref[...] = jnp.zeros_like(acc_ref)

    # bf16 loads (half the HBM stream); upcast in-register so the reduce
    # accumulates in f32 and the multiply stays portable (v5e VPU has no bf16).
    e1 = emb1_ref[...].astype(jnp.float32)            # [Bb, Ab, H]
    e2 = emb2_ref[...].astype(jnp.float32)
    m1 = m1_ref[...].astype(jnp.float32)              # [Bb, Ab, 1]  lane-splat broadcast
    m2 = m2_ref[...].astype(jnp.float32)
    acc_ref[...] += jnp.sum(e1 * m1 - e2 * m2, axis=1)      # [Bb, H]

    @pl.when(a_idx == pl.num_programs(1) - 1)
    def _finalize():
        d = acc_ref[...]                              # emb1_mol - emb2_mol, [Bb, H]
        gamma = gamma_ref[...]                        # [1, H]
        beta = beta_ref[...]                          # [1, H]

        # LayerNorm in f32 (eps = 1e-5, matching nn.LayerNorm defaults)
        mu = jnp.mean(d, axis=-1, keepdims=True)
        var = jnp.mean((d - mu) ** 2, axis=-1, keepdims=True)
        ln = (d - mu) * jax.lax.rsqrt(var + 1e-5) * gamma + beta      # LN(e1-e2)
        # exact identity (mean/var are sign-invariant): LN(-x) = 2*beta - LN(x)
        ln_neg = 2.0 * beta - ln                                       # LN(e2-e1)

        # stack pos/neg branches -> one matmul chain, double MXU row occupancy
        x = jnp.concatenate([ln, ln_neg], axis=0)                      # [2Bb, H]

        def silu(v):
            return v * jax.nn.sigmoid(v)

        def mm(v, w_ref):
            # bf16 operands, f32 accumulation on the MXU
            return jnp.dot(v.astype(jnp.bfloat16), w_ref[...],
                           preferred_element_type=jnp.float32)

        h = silu(mm(x, w1_ref) + b1_ref[...])                          # [2Bb, 2H]
        h = silu(mm(h, w2_ref) + b2_ref[...])                          # [2Bb, H]
        h = silu(mm(h, w3_ref) + b3_ref[...])                          # [2Bb, H/2]
        # last layer has N=1: VPU lane-reduce instead of a 1-column MXU pass
        y = jnp.sum(h * w4_ref[...], axis=-1, keepdims=True) + b4_ref[...]  # [2Bb, 1]

        bb = d.shape[0]
        out_ref[:, 0:1] = y[:bb]                      # positive branch
        out_ref[:, 1:2] = y[bb:]                      # negative branch


def _pick_tiles(B, A, H, b_blk=None, a_blk=None):
    """Tile selection per the perf review: 128-aligned padded A, big tiles,
    >=2 batch blocks (v7x: 2 TensorCores), emb block capped at ~2 MiB."""
    if a_blk is None:
        a_blk = min(512, _round_up(A, 128))
    A_pad = _round_up(A, a_blk)
    B_pad = _round_up(B, 8)
    if b_blk is None:
        b_blk = B_pad if B_pad < 16 else 8
        # grow toward MXU row counts while keeping >= 2 batch blocks
        while (b_blk * 2 <= 128 and B_pad % (b_blk * 2) == 0
               and B_pad // (b_blk * 2) >= 2):
            b_blk *= 2
        # cap emb block: 2 inputs x 2 pipeline buffers (+ padded mask buffers)
        # must stay well inside v7x's 64 MiB physical VMEM.
        while b_blk > 8 and b_blk * a_blk * H * 2 > 2 * 1024 * 1024:
            b_blk //= 2
    B_pad = _round_up(B_pad, b_blk)
    return b_blk, a_blk, B_pad, A_pad


def pbcnet_readout_head(emb1, emb2, mask1, mask2, params, *, b_blk=None, a_blk=None):
    """Fused readout + head.  Returns (out_pos [B,1], out_neg [B,1])."""
    B, A, H = emb1.shape
    b_blk, a_blk, B_pad, A_pad = _pick_tiles(B, A, H, b_blk, a_blk)

    def prep_emb(e):
        # bf16 stream halves the dominant HBM traffic; pads are masked out anyway
        e = e.astype(jnp.bfloat16)
        return jnp.pad(e, ((0, B_pad - B), (0, A_pad - A), (0, 0)))

    def prep_mask(m):
        m = m.astype(jnp.bfloat16)
        m = jnp.pad(m, ((0, B_pad - B), (0, A_pad - A)))
        return m[:, :, None]                          # [B, A, 1]: broadcast-ready layout

    emb1p, emb2p = prep_emb(emb1), prep_emb(emb2)
    m1p, m2p = prep_mask(mask1), prep_mask(mask2)

    gamma, beta, w1, b1, w2, b2, w3, b3, w4, b4 = params
    # bf16 weights halve DMA/VMEM traffic for the MXU operands; biases, LN
    # params and the final VPU lane-reduce row stay f32.
    w1b = w1.astype(jnp.bfloat16)
    w2b = w2.astype(jnp.bfloat16)
    w3b = w3.astype(jnp.bfloat16)
    w4_row = w4.reshape(1, -1).astype(jnp.float32)    # [1, H//2]
    param_arrays = (gamma, beta, w1b, b1, w2b, b2, w3b, b3, w4_row, b4)

    grid = (B_pad // b_blk, A_pad // a_blk)
    emb_spec = lambda: pl.BlockSpec((b_blk, a_blk, H), lambda b, a: (b, a, 0))
    mask_spec = lambda: pl.BlockSpec((b_blk, a_blk, 1), lambda b, a: (b, a, 0))
    # params: whole-array blocks, constant block index -> fetched once, resident
    param_specs = [pl.BlockSpec(p.shape, lambda b, a: (0, 0)) for p in param_arrays]

    out = pl.pallas_call(
        _readout_head_kernel,
        out_shape=jax.ShapeDtypeStruct((B_pad, 2), jnp.float32),
        grid_spec=pltpu.PrefetchScalarGridSpec(
            num_scalar_prefetch=0,
            grid=grid,
            in_specs=[emb_spec(), emb_spec(), mask_spec(), mask_spec()] + param_specs,
            out_specs=pl.BlockSpec((b_blk, 2), lambda b, a: (b, 0)),
            scratch_shapes=[pltpu.VMEM((b_blk, H), jnp.float32)],
        ),
        compiler_params=pltpu.CompilerParams(
            dimension_semantics=("parallel", "arbitrary"),
            # above the 32 MiB scoped default, below v7x's 64 MiB physical VMEM;
            # actual footprint with the 2 MiB block cap stays far under this.
            vmem_limit_bytes=48 * 1024 * 1024,
        ),
    )(emb1p, emb2p, m1p, m2p, *param_arrays)

    return out[:B, 0:1], out[:B, 1:2]


# ----------------------------------------------------------------------------
# Parameter init (deterministic, mimicking nn.Linear / nn.LayerNorm defaults)
# ----------------------------------------------------------------------------
def init_params(key, hidden):
    dims = [(hidden, 2 * hidden), (2 * hidden, hidden),
            (hidden, hidden // 2), (hidden // 2, 1)]
    params = [jnp.ones((1, hidden), jnp.float32),      # LayerNorm gamma
              jnp.zeros((1, hidden), jnp.float32)]     # LayerNorm beta
    for (fan_in, fan_out) in dims:
        key, kw, kb = jax.random.split(key, 3)
        bound = 1.0 / jnp.sqrt(fan_in)
        w = jax.random.uniform(kw, (fan_in, fan_out), jnp.float32, -bound, bound)
        b = jax.random.uniform(kb, (1, fan_out), jnp.float32, -bound, bound)
        params.extend([w, b])
    return tuple(params)


# ----------------------------------------------------------------------------
# Full forward (glue in plain JAX, hot paths in Pallas)
# ----------------------------------------------------------------------------
def pbcnetv2_forward(g1, g2, params):
    g1 = dict(g1)
    g2 = dict(g2)
    # bond_scalar clip: plain-JAX glue, consumed only by the external encoder
    g1["bond_scalar"] = jnp.clip(g1["bond_scalar"].astype(jnp.int32), 0, 4)
    g2["bond_scalar"] = jnp.clip(g2["bond_scalar"].astype(jnp.int32), 0, 4)

    # apply_edges(src_norm_dst) + apply_edges(fn.v_sub_u), both graphs in one call
    dist1, vec1, dist2, vec2 = edge_geometry_pair(
        g1["pos_src"], g1["pos_dst"], g2["pos_src"], g2["pos_dst"])

    # TODO(synk): TensorNet encoder not reproduced; per-atom embeddings g["emb"]
    # stand in for self.encoder(g, bb)[0].
    out_pos, out_neg = pbcnet_readout_head(
        g1["emb"], g2["emb"], g1["type"], g2["type"], params)

    return (out_pos, out_neg), (dist1, vec1, dist2, vec2)


# ----------------------------------------------------------------------------
# Pure-JAX reference (same mixed precision) for a correctness cross-check
# ----------------------------------------------------------------------------
def _reference_head(emb1, emb2, mask1, mask2, params):
    gamma, beta, w1, b1, w2, b2, w3, b3, w4, b4 = params

    def q(x):  # replicate the kernel's bf16 input quantization
        return x.astype(jnp.bfloat16).astype(jnp.float32)

    e1 = jnp.sum(q(emb1) * q(mask1)[:, :, None], axis=1)
    e2 = jnp.sum(q(emb2) * q(mask2)[:, :, None], axis=1)

    def ln(x):
        mu = jnp.mean(x, axis=-1, keepdims=True)
        var = jnp.mean((x - mu) ** 2, axis=-1, keepdims=True)
        return (x - mu) * jax.lax.rsqrt(var + 1e-5) * gamma + beta

    def silu(v):
        return v * jax.nn.sigmoid(v)

    def dot_bf16(v, w):
        return jnp.dot(v.astype(jnp.bfloat16), w.astype(jnp.bfloat16),
                       preferred_element_type=jnp.float32)

    def fnn(x):
        h = silu(dot_bf16(x, w1) + b1)
        h = silu(dot_bf16(h, w2) + b2)
        h = silu(dot_bf16(h, w3) + b3)
        return jnp.dot(h, w4) + b4

    return fnn(ln(e1 - e2)), fnn(ln(e2 - e1))


# ----------------------------------------------------------------------------
# Example run
# ----------------------------------------------------------------------------
if __name__ == "__main__":
    key = jax.random.PRNGKey(0)
    B, A, H = 16, 200, 32        # graphs/batch, atoms/graph (non-128-multiple), hidden
    E1, E2 = 48, 56              # edges per graph

    keys = jax.random.split(key, 12)
    params = init_params(keys[0], H)

    def make_graph(ks, n_edges):
        return {
            "pos_src": jax.random.normal(ks[0], (n_edges, 3), jnp.float32),
            "pos_dst": jax.random.normal(ks[1], (n_edges, 3), jnp.float32),
            "emb": jax.random.normal(ks[2], (B, A, H), jnp.float32),
            "type": (jax.random.uniform(ks[3], (B, A)) > 0.3).astype(jnp.float32),
            "bond_scalar": jax.random.randint(ks[4], (n_edges,), -2, 8).astype(jnp.float32),
        }

    g1 = make_graph(keys[1:6], E1)
    g2 = make_graph(keys[6:11], E2)

    (out_pos, out_neg), (dist1, vec1, dist2, vec2) = pbcnetv2_forward(g1, g2, params)
    jax.block_until_ready((out_pos, out_neg, dist1, vec1, dist2, vec2))

    # shape checks
    assert out_pos.shape == (B, 1) and out_neg.shape == (B, 1)
    assert dist1.shape == (E1,) and vec1.shape == (E1, 3)
    assert dist2.shape == (E2,) and vec2.shape == (E2, 3)

    # numerical cross-check vs. pure-JAX reference (same mixed precision)
    ref_pos, ref_neg = _reference_head(g1["emb"], g2["emb"], g1["type"], g2["type"], params)
    ref_d1 = jnp.sqrt(jnp.sum((g1["pos_src"] - g1["pos_dst"]) ** 2, axis=1))
    ref_v1 = g1["pos_dst"] - g1["pos_src"]
    ref_d2 = jnp.sqrt(jnp.sum((g2["pos_src"] - g2["pos_dst"]) ** 2, axis=1))
    ref_v2 = g2["pos_dst"] - g2["pos_src"]
    assert bool(jnp.allclose(out_pos, ref_pos, atol=2e-2, rtol=2e-2))
    assert bool(jnp.allclose(out_neg, ref_neg, atol=2e-2, rtol=2e-2))
    assert bool(jnp.allclose(dist1, ref_d1, atol=1e-5, rtol=1e-5))
    assert bool(jnp.allclose(vec1, ref_v1, atol=1e-6, rtol=1e-6))
    assert bool(jnp.allclose(dist2, ref_d2, atol=1e-5, rtol=1e-5))
    assert bool(jnp.allclose(vec2, ref_v2, atol=1e-6, rtol=1e-6))

    print("KERNEL_OK")
</pallas_src>

<mosaic_0001>
module attributes {stable_mosaic.version = 11 : i64} {
  func.func @_edge_geom_kernel(%arg0: i32, %arg1: memref<3x128xf32, #tpu.memory_space<vmem>>, %arg2: memref<3x128xf32, #tpu.memory_space<vmem>>, %arg3: memref<1x128xf32, #tpu.memory_space<vmem>>, %arg4: memref<3x128xf32, #tpu.memory_space<vmem>>) attributes {dimension_semantics = [#tpu.dimension_semantics<parallel>], iteration_bounds = array<i64: 1>, scalar_prefetch = 0 : i64, scratch_operands = 0 : i64, tpu.core_type = #tpu.core_type<tc>, window_params = [{transform_indices = @transform_0, window_bounds = array<i64: 3, 128>}, {transform_indices = @transform_1, window_bounds = array<i64: 3, 128>}, {transform_indices = @transform_2, window_bounds = array<i64: 1, 128>}, {transform_indices = @transform_3, window_bounds = array<i64: 3, 128>}]} {
    %c0 = arith.constant 0 : index
    %c0_0 = arith.constant 0 : index
    %0 = vector.load %arg1[%c0, %c0_0] : memref<3x128xf32, #tpu.memory_space<vmem>>, vector<3x128xf32>
    %c0_1 = arith.constant 0 : index
    %c0_2 = arith.constant 0 : index
    %1 = vector.load %arg2[%c0_1, %c0_2] : memref<3x128xf32, #tpu.memory_space<vmem>>, vector<3x128xf32>
    %2 = arith.subf %0, %1 : vector<3x128xf32>
    %3 = arith.mulf %2, %2 : vector<3x128xf32>
    %4 = vector.extract_strided_slice %3 {offsets = [0, 0], sizes = [1, 128], strides = [1, 1]} : vector<3x128xf32> to vector<1x128xf32>
    %5 = vector.extract_strided_slice %3 {offsets = [1, 0], sizes = [1, 128], strides = [1, 1]} : vector<3x128xf32> to vector<1x128xf32>
    %6 = arith.addf %4, %5 : vector<1x128xf32>
    %7 = vector.extract_strided_slice %3 {offsets = [2, 0], sizes = [1, 128], strides = [1, 1]} : vector<3x128xf32> to vector<1x128xf32>
    %8 = arith.addf %6, %7 : vector<1x128xf32>
    %9 = math.sqrt %8 : vector<1x128xf32>
    %c0_3 = arith.constant 0 : index
    %c0_4 = arith.constant 0 : index
    %10 = vector.load %arg3[%c0_3, %c0_4] : memref<1x128xf32, #tpu.memory_space<vmem>>, vector<1x128xf32>
    tpu.vector_store %arg3[%c0_3, %c0_4], %9 {strides = array<i32>} : memref<1x128xf32, #tpu.memory_space<vmem>>, vector<1x128xf32>,
    %11 = arith.subf %1, %0 : vector<3x128xf32>
    %c0_5 = arith.constant 0 : index
    %c0_6 = arith.constant 0 : index
    %12 = vector.load %arg4[%c0_5, %c0_6] : memref<3x128xf32, #tpu.memory_space<vmem>>, vector<3x128xf32>
    tpu.vector_store %arg4[%c0_5, %c0_6], %11 {strides = array<i32>} : memref<3x128xf32, #tpu.memory_space<vmem>>, vector<3x128xf32>,
    return
  }
  func.func @transform_0(%arg0: i32) -> (i32, i32) {
    %c0_i32 = arith.constant 0 : i32
    %c0_i32_0 = arith.constant 0 : i32
    return %c0_i32, %arg0 : i32, i32
  }
  func.func @transform_1(%arg0: i32) -> (i32, i32) {
    %c0_i32 = arith.constant 0 : i32
    %c0_i32_0 = arith.constant 0 : i32
    return %c0_i32, %arg0 : i32, i32
  }
  func.func @transform_2(%arg0: i32) -> (i32, i32) {
    %c0_i32 = arith.constant 0 : i32
    %c0_i32_0 = arith.constant 0 : i32
    return %c0_i32, %arg0 : i32, i32
  }
  func.func @transform_3(%arg0: i32) -> (i32, i32) {
    %c0_i32 = arith.constant 0 : i32
    %c0_i32_0 = arith.constant 0 : i32
    return %c0_i32, %arg0 : i32, i32
  }
}

</mosaic_0001>

<llo_original>
// kernel: tpu_custom_call.1
$region0: #{tpu_custom_call.1}
  #allocation0 [shape = 'u32[]', space=smem, size = 0x4, offset = 0x4, fixed_abs, tag = 'smem constant byte address 0x4 - core index']
  #allocation1 [shape = 'u32[144,128]{1,0:T(1,128)}', space=vmem, size = 0x12000, scoped, tag = 'internal scratch']
  %s0 = inlined_call_operand.hbm [shape: f32[3,128], index: 0, kind: input, shape index: {}]
  %s1 = inlined_call_operand.hbm [shape: f32[3,128], index: 1, kind: input, shape index: {}]
  %s2 = inlined_call_operand.hbm [shape: f32[1,128], index: 2, kind: output, shape index: {0}]
  %s3 = inlined_call_operand.hbm [shape: f32[3,128], index: 3, kind: output, shape index: {1}]
  %4 = xla_tuple %s2, %s3
  %s5 = sld [smem:[#allocation0]]
  $region34: #{tpu_custom_call.1} parent=0
    _
  %s7 = ssub.s32 1, %s5
  %s8 = scalar_select 0, %s7, %s5
  $region1: #{tpu_custom_call.1} parent=0
    #allocation2 [shape = 'u8[2048]{0}', space=vmem, size = 0x800, scoped, tag = 'input window, operand 0, single buffered']
    #allocation3 [shape = 's32[1]{0}', space=sflag, size = 0x4, scoped, tag = 'scoped memory for tpu_custom_call.1']
    #allocation4 [shape = 's32[1]{0}', space=sflag, size = 0x4, scoped, tag = 'scoped memory for tpu_custom_call.1']
    #allocation5 [shape = 'u8[2048]{0}', space=vmem, size = 0x800, scoped, tag = 'input window, operand 1, single buffered']
    #allocation6 [shape = 's32[1]{0}', space=sflag, size = 0x4, scoped, tag = 'scoped memory for tpu_custom_call.1']
    #allocation7 [shape = 'u8[512]{0}', space=vmem, size = 0x400, scoped, tag = 'output window, operand 0, single buffered']
    #allocation8 [shape = 'u8[2048]{0}', space=vmem, size = 0x800, scoped, tag = 'output window, operand 1, single buffered']
    #allocation9 [shape = 's32[1]{0}', space=sflag, size = 0x4, scoped, tag = 'scoped memory for tpu_custom_call.1']
    %9 = vsyncpa [#allocation3], 0
    %10 = vsyncpa [#allocation6], 0
    %11 = vsyncpa [#allocation4], 0
    %12 = vsyncpa [#allocation9], 0
    // Predicated region
    $region2: #{tpu_custom_call.1} parent=1 // pred_check
      _
    $region3: #{tpu_custom_call.1} parent=1 // pred_check_branch
      %14 = sbr.rel (0) target = $region5
    $region4: #{tpu_custom_call.1} parent=1 // pred_region
      %s16 = ssub.s32 64, 64
      %17 = vsyncadd [#allocation3], %s16
      %s19 = sshll.u32 [#allocation2], 4
      %s20 = int_to_ptr.vmem [resolvable:$true] %s19
      %22 = dma.hbm_to_vmem [thread:$0]  %s0, 64, %s20, [#allocation3]
    $region5: #{tpu_custom_call.1} parent=1 // pred_fallthru
      _
    // Predicated region
    $region6: #{tpu_custom_call.1} parent=1 // pred_check
      _
    $region7: #{tpu_custom_call.1} parent=1 // pred_check_branch
      %24 = sbr.rel (0) target = $region9
    $region8: #{tpu_custom_call.1} parent=1 // pred_region
      %s26 = ssub.s32 64, 64
      %27 = vsyncadd [#allocation6], %s26
      %s29 = sshll.u32 [#allocation5], 4
      %s30 = int_to_ptr.vmem [resolvable:$true] %s29
      %32 = dma.hbm_to_vmem [thread:$0]  %s1, 64, %s30, [#allocation6]
    $region9: #{tpu_custom_call.1} parent=1 // pred_fallthru
      _
    // Predicated region
    $region10: #{tpu_custom_call.1} parent=1 // pred_check
      _
    $region11: #{tpu_custom_call.1} parent=1 // pred_check_branch
      %34 = sbr.rel (0) target = $region13
    $region12: #{tpu_custom_call.1} parent=1 // pred_region
      %35 = dma.done [#allocation3], 64
    $region13: #{tpu_custom_call.1} parent=1 // pred_fallthru
      _
    // Predicated region
    $region14: #{tpu_custom_call.1} parent=1 // pred_check
      _
    $region15: #{tpu_custom_call.1} parent=1 // pred_check_branch
      %37 = sbr.rel (0) target = $region17
    $region16: #{tpu_custom_call.1} parent=1 // pred_region
      %38 = dma.done [#allocation6], 64
    $region17: #{tpu_custom_call.1} parent=1 // pred_fallthru
      _
    %v39 = vld [vmem:[#allocation2] sm:$0x7]
    %v40 = vld [vmem:[#allocation5] sm:$0x7]
    %v41 = vsub.f32 %v39, %v40
    %v42 = vmul.f32 %v41, %v41
    %v44 = vrot.slane %v42, 1
    %v46 = vadd.f32 %v42, %v44
    %v47 = vrot.slane %v42, 2
    %v49 = vadd.f32 %v46, %v47
    %v50 = vrsqrt.pop %v49
    %v51 = vmul.f32 %v49, %v50
    %vm52 = vcmp.eq.f32.partialorder %v49, inf
    %v53 = vsel %vm52, %v49, %v51
    %vm54 = vcmp.eq.f32.partialorder %v49, 0.0
    %v55 = vand.u32 %v49, 2147483648
    %v56 = vsel %vm54, %v55, %v53
    %57 = vst [vmem:[#allocation7] sm:$0x1] %v56
    %v58 = vsub.f32 %v40, %v39
    %59 = vst [vmem:[#allocation8] sm:$0x7] %v58
    // Predicated region
    $region18: #{tpu_custom_call.1} parent=1 // pred_check
      _
    $region19: #{tpu_custom_call.1} parent=1 // pred_check_branch
      %61 = sbr.rel (0) target = $region21
    $region20: #{tpu_custom_call.1} parent=1 // pred_region
      %s63 = ssub.s32 16, 16
      %64 = vsyncadd [#allocation4], %s63
      %s66 = sshll.u32 [#allocation7], 4
      %s67 = int_to_ptr.vmem [resolvable:$true] %s66
      %69 = dma.vmem_to_hbm [thread:$0]  %s67, 16, %s2, [#allocation4]
    $region21: #{tpu_custom_call.1} parent=1 // pred_fallthru
      _
    // Predicated region
    $region22: #{tpu_custom_call.1} parent=1 // pred_check
      _
    $region23: #{tpu_custom_call.1} parent=1 // pred_check_branch
      %71 = sbr.rel (0) target = $region25
    $region24: #{tpu_custom_call.1} parent=1 // pred_region
      %s73 = ssub.s32 64, 64
      %74 = vsyncadd [#allocation9], %s73
      %s76 = sshll.u32 [#allocation8], 4
      %s77 = int_to_ptr.vmem [resolvable:$true] %s76
      %79 = dma.vmem_to_hbm [thread:$0]  %s77, 64, %s3, [#allocation9]
    $region25: #{tpu_custom_call.1} parent=1 // pred_fallthru
      _
    // Predicated region
    $region26: #{tpu_custom_call.1} parent=1 // pred_check
      _
    $region27: #{tpu_custom_call.1} parent=1 // pred_check_branch
      %81 = sbr.rel (0) target = $region29
    $region28: #{tpu_custom_call.1} parent=1 // pred_region
      %82 = dma.done [#allocation4], 16
    $region29: #{tpu_custom_call.1} parent=1 // pred_fallthru
      _
    // Predicated region
    $region30: #{tpu_custom_call.1} parent=1 // pred_check
      _
    $region31: #{tpu_custom_call.1} parent=1 // pred_check_branch
      %84 = sbr.rel (0) target = $region33
    $region32: #{tpu_custom_call.1} parent=1 // pred_region
      %85 = dma.done [#allocation9], 64
    $region33: #{tpu_custom_call.1} parent=1 // pred_fallthru
      _
    %86 = vsyncpa [#allocation3], 1
    %87 = vsyncpa [#allocation6], 1
    %88 = vsyncpa [#allocation4], 1
    %89 = vsyncpa [#allocation9], 1

</llo_original>
